<compile_context>
chip_gen: v7x
topology: tpu7x:2x2x1
jax: 0.10.0
libtpu: 0.0.40
codegen_flags: <defaults>
</compile_context>

<pallas_src>
import functools
import math

import jax
import jax.numpy as jnp
from jax.experimental import pallas as pl
from jax.experimental.pallas import tpu as pltpu

_EPS_DEFAULT = 1e-6
_SPLIT_THRESHOLD_BYTES = 2 * 1024 * 1024   # force >=2 parallel blocks above this


# ----------------------------------------------------------------------------
# Hardware-aware tile / VMEM budgets
# ----------------------------------------------------------------------------
def _vmem_capacity_bytes():
    """Physical VMEM per TensorCore, or None if it cannot be queried."""
    try:
        info = pltpu.get_tpu_info()
        for attr in ("vmem_capacity_bytes", "vmem_size_bytes", "vmem_bytes"):
            v = getattr(info, attr, None)
            if isinstance(v, int) and v > 0:
                return v
    except Exception:
        pass
    return None


def _budgets(itemsize):
    """Returns (elements-per-activation-block budget, vmem_limit_bytes)."""
    cap = _vmem_capacity_bytes()
    if cap is not None and cap > 64 * 1024 * 1024:
        # v5e / v6e: 128 MiB physical VMEM.
        pipeline_bytes, vmem_limit = 40 << 20, 80 << 20
    else:
        # v7x (64 MiB per TC) or unknown hardware: stay conservative.
        pipeline_bytes, vmem_limit = 24 << 20, 48 << 20
    # Per element of the activation block:
    #   2x double-buffered input + 2x double-buffered output (in input dtype)
    #   + ~2 f32 temporaries inside the kernel body.
    per_elem = 4 * itemsize + 8
    return max(1, pipeline_bytes // per_elem), vmem_limit


def _pick_tile(total, chan, *, align, itemsize, elems_budget, want_split):
    """Rows (or spatial columns) per block: biggest aligned tile in budget."""
    t = max(1, elems_budget // max(1, chan))
    if total <= t:
        # Whole extent fits in one block.  For mid/large inputs force >=2
        # parallel blocks so both v7x TensorCores get work.
        if (want_split
                and total * chan * itemsize >= _SPLIT_THRESHOLD_BYTES
                and total >= 2 * align):
            half = -(-total // 2)                 # ceil(total / 2)
            return min(total, -(-half // align) * align)
        return total                              # full-extent block: legal
    return max(align, (t // align) * align)


# ----------------------------------------------------------------------------
# Kernels (all math in f32, output stored in the input dtype)
# ----------------------------------------------------------------------------
def _ln_rows_kernel(x_ref, g_ref, b_ref, o_ref, *, eps, n_chan):
    """channels_last: x_ref is a (TILE_M, C) tile; normalize each row over C."""
    x = x_ref[...].astype(jnp.float32)
    inv_c = 1.0 / n_chan
    mean = jnp.sum(x, axis=-1, keepdims=True) * inv_c
    xc = x - mean
    var = jnp.sum(xc * xc, axis=-1, keepdims=True) * inv_c   # two-pass, >= 0
    rstd = jax.lax.rsqrt(var + eps)                          # one EUP rsqrt/row
    o_ref[...] = (xc * rstd * g_ref[...] + b_ref[...]).astype(o_ref.dtype)


def _ln_cfirst_kernel(x_ref, g_ref, b_ref, o_ref, *, eps, n_chan):
    """channels_first: x_ref is a (1, C, TILE_S) tile; normalize over C."""
    x = x_ref[...].astype(jnp.float32)
    inv_c = 1.0 / n_chan
    mean = jnp.sum(x, axis=1, keepdims=True) * inv_c
    xc = x - mean
    var = jnp.sum(xc * xc, axis=1, keepdims=True) * inv_c    # two-pass, >= 0
    rstd = jax.lax.rsqrt(var + eps)
    g = g_ref[...][None]      # (C, 1) -> (1, C, 1), already f32 (pre-cast)
    b = b_ref[...][None]
    o_ref[...] = (xc * rstd * g + b).astype(o_ref.dtype)


# ----------------------------------------------------------------------------
# Wrappers (pallas_call plumbing)
# ----------------------------------------------------------------------------
def _layer_norm_channels_last(x, weight, bias, eps):
    """x: (..., C); F.layer_norm over the last dim."""
    orig_shape = x.shape
    c = orig_shape[-1]
    m = math.prod(orig_shape[:-1])
    x2 = x.reshape(m, c)                          # free reshape (contiguous)

    itemsize = x.dtype.itemsize
    elems_budget, vmem_limit = _budgets(itemsize)
    align = max(8, 32 // itemsize)                # 8 f32 / 16 bf16 / 32 int8 rows
    tile_m = _pick_tile(m, c, align=align, itemsize=itemsize,
                        elems_budget=elems_budget, want_split=True)
    grid = (pl.cdiv(m, tile_m),)
    kern = functools.partial(_ln_rows_kernel, eps=eps, n_chan=c)

    g32 = weight.astype(jnp.float32).reshape(1, c)
    b32 = bias.astype(jnp.float32).reshape(1, c)

    out = pl.pallas_call(
        kern,
        out_shape=jax.ShapeDtypeStruct((m, c), x.dtype),
        grid=grid,
        in_specs=[
            pl.BlockSpec((tile_m, c), lambda i: (i, 0)),   # tokens (pipelined)
            pl.BlockSpec((1, c), lambda i: (0, 0)),        # gamma (resident f32)
            pl.BlockSpec((1, c), lambda i: (0, 0)),        # beta  (resident f32)
        ],
        out_specs=pl.BlockSpec((tile_m, c), lambda i: (i, 0)),
        compiler_params=pltpu.CompilerParams(
            dimension_semantics=("parallel",),
            vmem_limit_bytes=vmem_limit,
        ),
        cost_estimate=pl.CostEstimate(
            flops=8 * m * c,
            transcendentals=m,
            bytes_accessed=2 * m * c * itemsize + 2 * c * 4,
        ),
    )(x2, g32, b32)
    return out.reshape(orig_shape)


def _layer_norm_channels_first(x, weight, bias, eps):
    """x: (N, C, H, W); normalize over the channel axis (dim 1), no transpose."""
    n, c, h, w = x.shape
    hw = h * w
    x3 = x.reshape(n, c, hw)                      # free reshape (contiguous)

    itemsize = x.dtype.itemsize
    elems_budget, vmem_limit = _budgets(itemsize)
    tile_s = _pick_tile(hw, c, align=128, itemsize=itemsize,
                        elems_budget=elems_budget,
                        want_split=(n == 1))      # batch axis already parallel
    grid = (n, pl.cdiv(hw, tile_s))
    kern = functools.partial(_ln_cfirst_kernel, eps=eps, n_chan=c)

    g32 = weight.astype(jnp.float32).reshape(c, 1)
    b32 = bias.astype(jnp.float32).reshape(c, 1)

    out = pl.pallas_call(
        kern,
        out_shape=jax.ShapeDtypeStruct((n, c, hw), x.dtype),
        grid=grid,
        in_specs=[
            pl.BlockSpec((1, c, tile_s), lambda i, j: (i, 0, j)),
            pl.BlockSpec((c, 1), lambda i, j: (0, 0)),
            pl.BlockSpec((c, 1), lambda i, j: (0, 0)),
        ],
        out_specs=pl.BlockSpec((1, c, tile_s), lambda i, j: (i, 0, j)),
        compiler_params=pltpu.CompilerParams(
            dimension_semantics=("parallel", "parallel"),
            vmem_limit_bytes=vmem_limit,
        ),
        cost_estimate=pl.CostEstimate(
            flops=8 * n * c * hw,
            transcendentals=n * hw,
            bytes_accessed=2 * n * c * hw * itemsize + 2 * c * 4,
        ),
    )(x3, g32, b32)
    return out.reshape(n, c, h, w)


def layer_norm(x, weight, bias, eps=_EPS_DEFAULT, data_format="channels_last"):
    """Matches ConvNeXt's LayerNorm.forward for both data formats."""
    if data_format == "channels_last":
        return _layer_norm_channels_last(x, weight, bias, eps)
    elif data_format == "channels_first":
        return _layer_norm_channels_first(x, weight, bias, eps)
    raise NotImplementedError(data_format)


# ----------------------------------------------------------------------------
# Pure-JAX references (mirror the PyTorch forward exactly)
# ----------------------------------------------------------------------------
def _ref_channels_last(x, w, b, eps):
    x32 = x.astype(jnp.float32)
    mu = x32.mean(-1, keepdims=True)
    var = ((x32 - mu) ** 2).mean(-1, keepdims=True)
    return ((x32 - mu) / jnp.sqrt(var + eps) * w + b).astype(x.dtype)


def _ref_channels_first(x, w, b, eps):
    x32 = x.astype(jnp.float32)
    u = x32.mean(1, keepdims=True)
    s = ((x32 - u) ** 2).mean(1, keepdims=True)
    y = (x32 - u) / jnp.sqrt(s + eps)
    return (w[:, None, None] * y + b[:, None, None]).astype(x.dtype)


# ----------------------------------------------------------------------------
# Main
# ----------------------------------------------------------------------------
if __name__ == "__main__":
    key = jax.random.PRNGKey(0)
    k1, k2, k3, k4, k5, k6, k7 = jax.random.split(key, 7)

    n, h, w, c = 2, 16, 16, 128           # lane-dense channel width
    eps = 1e-6
    gamma = 1.0 + 0.1 * jax.random.normal(k2, (c,), jnp.float32)
    beta = 0.1 * jax.random.normal(k3, (c,), jnp.float32)

    # --- channels_last (NHWC), f32 ---
    x_cl = jax.random.normal(k1, (n, h, w, c), jnp.float32)
    f_cl = jax.jit(functools.partial(layer_norm, eps=eps,
                                     data_format="channels_last"))
    y_cl = f_cl(x_cl, gamma, beta)
    jax.block_until_ready(y_cl)
    assert y_cl.shape == x_cl.shape
    assert jnp.allclose(y_cl, _ref_channels_last(x_cl, gamma, beta, eps),
                        atol=1e-4, rtol=1e-4)

    # --- channels_last, non-zero-mean inputs (exercises variance numerics) ---
    y_off = f_cl(x_cl + 5.0, gamma, beta)
    jax.block_until_ready(y_off)
    assert jnp.allclose(y_off, _ref_channels_last(x_cl + 5.0, gamma, beta, eps),
                        atol=1e-4, rtol=1e-4)

    # --- channels_first (NCHW), f32 ---
    x_cf = jax.random.normal(k4, (n, c, h, w), jnp.float32)
    f_cf = jax.jit(functools.partial(layer_norm, eps=eps,
                                     data_format="channels_first"))
    y_cf = f_cf(x_cf, gamma, beta)
    jax.block_until_ready(y_cf)
    assert y_cf.shape == x_cf.shape
    assert jnp.allclose(y_cf, _ref_channels_first(x_cf, gamma, beta, eps),
                        atol=1e-4, rtol=1e-4)

    # --- channels_last, bf16 activations (f32 math inside the kernel) ---
    x_bf = x_cl.astype(jnp.bfloat16)
    y_bf = f_cl(x_bf, gamma, beta)
    jax.block_until_ready(y_bf)
    assert y_bf.dtype == jnp.bfloat16
    assert jnp.allclose(y_bf.astype(jnp.float32),
                        _ref_channels_last(x_bf, gamma, beta, eps).astype(jnp.float32),
                        atol=2e-2, rtol=2e-2)

    # --- odd, non-128-aligned shape (masked remainder handling) ---
    c_odd = 48
    g_odd = jnp.ones((c_odd,), jnp.float32)
    b_odd = jnp.zeros((c_odd,), jnp.float32)
    x_odd = jax.random.normal(k5, (2, 7, 9, c_odd), jnp.float32)
    y_odd = layer_norm(x_odd, g_odd, b_odd, eps=eps, data_format="channels_last")
    jax.block_until_ready(y_odd)
    assert jnp.allclose(y_odd, _ref_channels_last(x_odd, g_odd, b_odd, eps),
                        atol=1e-4, rtol=1e-4)

    # --- tiled / forced-split path, channels_last with a remainder block ---
    c_t = 192
    g_t = 1.0 + 0.05 * jax.random.normal(k2, (c_t,), jnp.float32)
    b_t = 0.05 * jax.random.normal(k3, (c_t,), jnp.float32)
    x_t = jax.random.normal(k6, (4, 25, 41, c_t), jnp.float32)   # 4100 rows
    y_t = layer_norm(x_t, g_t, b_t, eps=eps, data_format="channels_last")
    jax.block_until_ready(y_t)
    assert jnp.allclose(y_t, _ref_channels_last(x_t, g_t, b_t, eps),
                        atol=1e-4, rtol=1e-4)

    # --- tiled / forced-split path, channels_first with a remainder block ---
    c_f = 96
    g_f = 1.0 + 0.05 * jax.random.normal(k2, (c_f,), jnp.float32)
    b_f = 0.05 * jax.random.normal(k3, (c_f,), jnp.float32)
    x_f = jax.random.normal(k7, (1, c_f, 80, 78), jnp.float32)   # HW = 6240
    y_f = layer_norm(x_f, g_f, b_f, eps=eps, data_format="channels_first")
    jax.block_until_ready(y_f)
    assert jnp.allclose(y_f, _ref_channels_first(x_f, g_f, b_f, eps),
                        atol=1e-4, rtol=1e-4)

    print("KERNEL_OK")
</pallas_src>

<mosaic_0001>
module attributes {stable_mosaic.version = 11 : i64} {
  func.func @_ln_rows_kernel(%arg0: i32, %arg1: memref<512x128xf32, #tpu.memory_space<vmem>>, %arg2: memref<1x128xf32, #tpu.memory_space<vmem>>, %arg3: memref<1x128xf32, #tpu.memory_space<vmem>>, %arg4: memref<512x128xf32, #tpu.memory_space<vmem>>) attributes {dimension_semantics = [#tpu.dimension_semantics<parallel>], iteration_bounds = array<i64: 1>, scalar_prefetch = 0 : i64, scratch_operands = 0 : i64, tpu.core_type = #tpu.core_type<tc>, window_params = [{transform_indices = @transform_0, window_bounds = array<i64: 512, 128>}, {pipeline_mode = #tpu.pipeline_mode<synchronous>, transform_indices = @transform_1, window_bounds = array<i64: 1, 128>}, {pipeline_mode = #tpu.pipeline_mode<synchronous>, transform_indices = @transform_2, window_bounds = array<i64: 1, 128>}, {transform_indices = @transform_3, window_bounds = array<i64: 512, 128>}]} {
    %c0 = arith.constant 0 : index
    %c0_0 = arith.constant 0 : index
    %0 = vector.load %arg1[%c0, %c0_0] : memref<512x128xf32, #tpu.memory_space<vmem>>, vector<512x128xf32>
    %cst = arith.constant dense<0.000000e+00> : vector<512xf32>
    %1 = vector.multi_reduction <add>, %0, %cst [1] : vector<512x128xf32> to vector<512xf32>
    %2 = vector.shape_cast %1 : vector<512xf32> to vector<512x1xf32>
    %cst_1 = arith.constant 7.812500e-03 : f32
    %3 = vector.broadcast %cst_1 : f32 to vector<512x1xf32>
    %4 = arith.mulf %2, %3 : vector<512x1xf32>
    %5 = vector.broadcast %4 : vector<512x1xf32> to vector<512x128xf32>
    %6 = arith.subf %0, %5 : vector<512x128xf32>
    %7 = arith.mulf %6, %6 : vector<512x128xf32>
    %cst_2 = arith.constant dense<0.000000e+00> : vector<512xf32>
    %8 = vector.multi_reduction <add>, %7, %cst_2 [1] : vector<512x128xf32> to vector<512xf32>
    %9 = vector.shape_cast %8 : vector<512xf32> to vector<512x1xf32>
    %cst_3 = arith.constant 7.812500e-03 : f32
    %10 = vector.broadcast %cst_3 : f32 to vector<512x1xf32>
    %11 = arith.mulf %9, %10 : vector<512x1xf32>
    %cst_4 = arith.constant 9.99999997E-7 : f32
    %12 = vector.broadcast %cst_4 : f32 to vector<512x1xf32>
    %13 = arith.addf %11, %12 : vector<512x1xf32>
    %14 = math.rsqrt %13 : vector<512x1xf32>
    %15 = vector.broadcast %14 : vector<512x1xf32> to vector<512x128xf32>
    %16 = arith.mulf %6, %15 : vector<512x128xf32>
    %c0_5 = arith.constant 0 : index
    %c0_6 = arith.constant 0 : index
    %17 = vector.load %arg2[%c0_5, %c0_6] : memref<1x128xf32, #tpu.memory_space<vmem>>, vector<1x128xf32>
    %18 = vector.broadcast %17 : vector<1x128xf32> to vector<512x128xf32>
    %19 = arith.mulf %16, %18 : vector<512x128xf32>
    %c0_7 = arith.constant 0 : index
    %c0_8 = arith.constant 0 : index
    %20 = vector.load %arg3[%c0_7, %c0_8] : memref<1x128xf32, #tpu.memory_space<vmem>>, vector<1x128xf32>
    %21 = vector.broadcast %20 : vector<1x128xf32> to vector<512x128xf32>
    %22 = arith.addf %19, %21 : vector<512x128xf32>
    %c0_9 = arith.constant 0 : index
    %c0_10 = arith.constant 0 : index
    %23 = vector.load %arg4[%c0_9, %c0_10] : memref<512x128xf32, #tpu.memory_space<vmem>>, vector<512x128xf32>
    tpu.vector_store %arg4[%c0_9, %c0_10], %22 {strides = array<i32>} : memref<512x128xf32, #tpu.memory_space<vmem>>, vector<512x128xf32>,
    return
  }
  func.func @transform_0(%arg0: i32) -> (i32, i32) {
    %c0_i32 = arith.constant 0 : i32
    %c0_i32_0 = arith.constant 0 : i32
    return %arg0, %c0_i32 : i32, i32
  }
  func.func @transform_1(%arg0: i32) -> (i32, i32) {
    %c0_i32 = arith.constant 0 : i32
    %c0_i32_0 = arith.constant 0 : i32
    %c0_i32_1 = arith.constant 0 : i32
    return %c0_i32, %c0_i32_0 : i32, i32
  }
  func.func @transform_2(%arg0: i32) -> (i32, i32) {
    %c0_i32 = arith.constant 0 : i32
    %c0_i32_0 = arith.constant 0 : i32
    %c0_i32_1 = arith.constant 0 : i32
    return %c0_i32, %c0_i32_0 : i32, i32
  }
  func.func @transform_3(%arg0: i32) -> (i32, i32) {
    %c0_i32 = arith.constant 0 : i32
    %c0_i32_0 = arith.constant 0 : i32
    return %arg0, %c0_i32 : i32, i32
  }
}

</mosaic_0001>

<llo_original>
// kernel: layer_norm.1
$region0: #{layer_norm.1}
  #allocation0 [shape = 'u32[]', space=smem, size = 0x4, offset = 0x4, fixed_abs, tag = 'smem constant byte address 0x4 - core index']
  #allocation1 [shape = 'u32[144,128]{1,0:T(1,128)}', space=vmem, size = 0x12000, scoped, tag = 'internal scratch']
  %s0 = inlined_call_operand.hbm [shape: f32[512,128], index: 0, kind: input, shape index: {}]
  %s1 = inlined_call_operand.vmem [shape: f32[1,128], index: 1, kind: input, shape index: {}]
  %s2 = inlined_call_operand.vmem [shape: f32[1,128], index: 2, kind: input, shape index: {}]
  %s3 = inlined_call_operand.hbm [shape: f32[512,128], index: 3, kind: output, shape index: {}]
  %s4 = sld [smem:[#allocation0]]
  $region26: #{layer_norm.1} parent=0
    _
  %s6 = ssub.s32 1, %s4
  %s7 = scalar_select 0, %s6, %s4
  $region1: #{layer_norm.1} parent=0
    #allocation2 [shape = 'u8[262144]{0}', space=vmem, size = 0x40000, scoped, tag = 'input window, operand 0, single buffered']
    #allocation3 [shape = 's32[1]{0}', space=sflag, size = 0x4, scoped, tag = 'scoped memory for layer_norm.1']
    #allocation4 [shape = 's32[1]{0}', space=sflag, size = 0x4, scoped, tag = 'scoped memory for layer_norm.1']
    #allocation5 [shape = 'u8[262144]{0}', space=vmem, size = 0x40000, scoped, tag = 'output window, operand 0, single buffered']
    %8 = vsyncpa [#allocation3], 0
    %9 = vsyncpa [#allocation4], 0
    // Predicated region
    $region2: #{layer_norm.1} parent=1 // pred_check
      _
    $region3: #{layer_norm.1} parent=1 // pred_check_branch
      %11 = sbr.rel (0) target = $region5
    $region4: #{layer_norm.1} parent=1 // pred_region
      %s13 = ssub.s32 8192, 8192
      %14 = vsyncadd [#allocation3], %s13
      %s15 = sshll.u32 [#allocation2], 4
      %s16 = int_to_ptr.vmem [resolvable:$true] %s15
      %21 = dma.hbm_to_vmem [thread:$0]  %s0, 8192, %s16, [#allocation3], 128, 128, 8
    $region5: #{layer_norm.1} parent=1 // pred_fallthru
      _
    // Predicated region
    $region6: #{layer_norm.1} parent=1 // pred_check
      _
    $region7: #{layer_norm.1} parent=1 // pred_check_branch
      %23 = sbr.rel (0) target = $region9
    $region8: #{layer_norm.1} parent=1 // pred_region
      _
    $region9: #{layer_norm.1} parent=1 // pred_fallthru
      _
    // Predicated region
    $region10: #{layer_norm.1} parent=1 // pred_check
      _
    $region11: #{layer_norm.1} parent=1 // pred_check_branch
      %25 = sbr.rel (0) target = $region13
    $region12: #{layer_norm.1} parent=1 // pred_region
      _
    $region13: #{layer_norm.1} parent=1 // pred_fallthru
      _
    // Predicated region
    $region14: #{layer_norm.1} parent=1 // pred_check
      _
    $region15: #{layer_norm.1} parent=1 // pred_check_branch
      %27 = sbr.rel (0) target = $region17
    $region16: #{layer_norm.1} parent=1 // pred_region
      %28 = dma.done [#allocation3], 8192
    $region17: #{layer_norm.1} parent=1 // pred_fallthru
      _
    %v29 = vld [vmem:[#allocation2] sm:$0xff]
    %v30 = vld [vmem:[#allocation2 + $0x8] sm:$0xff]
    %v31 = vld [vmem:[#allocation2 + $0x10] sm:$0xff]
    %v32 = vld [vmem:[#allocation2 + $0x18] sm:$0xff]
    %v33 = vld [vmem:[#allocation2 + $0x20] sm:$0xff]
    %v34 = vld [vmem:[#allocation2 + $0x28] sm:$0xff]
    %v35 = vld [vmem:[#allocation2 + $0x30] sm:$0xff]
    %v36 = vld [vmem:[#allocation2 + $0x38] sm:$0xff]
    %v37 = vld [vmem:[#allocation2 + $0x40] sm:$0xff]
    %v38 = vld [vmem:[#allocation2 + $0x48] sm:$0xff]
    %v39 = vld [vmem:[#allocation2 + $0x50] sm:$0xff]
    %v40 = vld [vmem:[#allocation2 + $0x58] sm:$0xff]
    %v41 = vld [vmem:[#allocation2 + $0x60] sm:$0xff]
    %v42 = vld [vmem:[#allocation2 + $0x68] sm:$0xff]
    %v43 = vld [vmem:[#allocation2 + $0x70] sm:$0xff]
    %v44 = vld [vmem:[#allocation2 + $0x78] sm:$0xff]
    %v45 = vld [vmem:[#allocation2 + $0x80] sm:$0xff]
    %v46 = vld [vmem:[#allocation2 + $0x88] sm:$0xff]
    %v47 = vld [vmem:[#allocation2 + $0x90] sm:$0xff]
    %v48 = vld [vmem:[#allocation2 + $0x98] sm:$0xff]
    %v49 = vld [vmem:[#allocation2 + $0xa0] sm:$0xff]
    %v50 = vld [vmem:[#allocation2 + $0xa8] sm:$0xff]
    %v51 = vld [vmem:[#allocation2 + $0xb0] sm:$0xff]
    %v52 = vld [vmem:[#allocation2 + $0xb8] sm:$0xff]
    %v53 = vld [vmem:[#allocation2 + $0xc0] sm:$0xff]
    %v54 = vld [vmem:[#allocation2 + $0xc8] sm:$0xff]
    %v55 = vld [vmem:[#allocation2 + $0xd0] sm:$0xff]
    %v56 = vld [vmem:[#allocation2 + $0xd8] sm:$0xff]
    %v57 = vld [vmem:[#allocation2 + $0xe0] sm:$0xff]
    %v58 = vld [vmem:[#allocation2 + $0xe8] sm:$0xff]
    %v59 = vld [vmem:[#allocation2 + $0xf0] sm:$0xff]
    %v60 = vld [vmem:[#allocation2 + $0xf8] sm:$0xff]
    %v61 = vld [vmem:[#allocation2 + $0x100] sm:$0xff]
    %v62 = vld [vmem:[#allocation2 + $0x108] sm:$0xff]
    %v63 = vld [vmem:[#allocation2 + $0x110] sm:$0xff]
    %v64 = vld [vmem:[#allocation2 + $0x118] sm:$0xff]
    %v65 = vld [vmem:[#allocation2 + $0x120] sm:$0xff]
    %v66 = vld [vmem:[#allocation2 + $0x128] sm:$0xff]
    %v67 = vld [vmem:[#allocation2 + $0x130] sm:$0xff]
    %v68 = vld [vmem:[#allocation2 + $0x138] sm:$0xff]
    %v69 = vld [vmem:[#allocation2 + $0x140] sm:$0xff]
    %v70 = vld [vmem:[#allocation2 + $0x148] sm:$0xff]
    %v71 = vld [vmem:[#allocation2 + $0x150] sm:$0xff]
    %v72 = vld [vmem:[#allocation2 + $0x158] sm:$0xff]
    %v73 = vld [vmem:[#allocation2 + $0x160] sm:$0xff]
    %v74 = vld [vmem:[#allocation2 + $0x168] sm:$0xff]
    %v75 = vld [vmem:[#allocation2 + $0x170] sm:$0xff]
    %v76 = vld [vmem:[#allocation2 + $0x178] sm:$0xff]
    %v77 = vld [vmem:[#allocation2 + $0x180] sm:$0xff]
    %v78 = vld [vmem:[#allocation2 + $0x188] sm:$0xff]
    %v79 = vld [vmem:[#allocation2 + $0x190] sm:$0xff]
    %v80 = vld [vmem:[#allocation2 + $0x198] sm:$0xff]
    %v81 = vld [vmem:[#allocation2 + $0x1a0] sm:$0xff]
    %v82 = vld [vmem:[#allocation2 + $0x1a8] sm:$0xff]
    %v83 = vld [vmem:[#allocation2 + $0x1b0] sm:$0xff]
    %v84 = vld [vmem:[#allocation2 + $0x1b8] sm:$0xff]
    %v85 = vld [vmem:[#allocation2 + $0x1c0] sm:$0xff]
    %v86 = vld [vmem:[#allocation2 + $0x1c8] sm:$0xff]
    %v87 = vld [vmem:[#allocation2 + $0x1d0] sm:$0xff]
    %v88 = vld [vmem:[#allocation2 + $0x1d8] sm:$0xff]
    %v89 = vld [vmem:[#allocation2 + $0x1e0] sm:$0xff]
    %v90 = vld [vmem:[#allocation2 + $0x1e8] sm:$0xff]
    %v91 = vld [vmem:[#allocation2 + $0x1f0] sm:$0xff]
    %v92 = vld [vmem:[#allocation2 + $0x1f8] sm:$0xff]
    %93 = vadd.xlane.f32.xlu0 %v29
    %v94 = vpop.xlane.xlu0 %93
    %95 = vadd.xlane.f32.xlu0 %v30
    %v96 = vpop.xlane.xlu0 %95
    %97 = vadd.xlane.f32.xlu0 %v31
    %v98 = vpop.xlane.xlu0 %97
    %99 = vadd.xlane.f32.xlu0 %v32
    %v100 = vpop.xlane.xlu0 %99
    %101 = vadd.xlane.f32.xlu0 %v33
    %v102 = vpop.xlane.xlu0 %101
    %103 = vadd.xlane.f32.xlu0 %v34
    %v104 = vpop.xlane.xlu0 %103
    %105 = vadd.xlane.f32.xlu0 %v35
    %v106 = vpop.xlane.xlu0 %105
    %107 = vadd.xlane.f32.xlu0 %v36
    %v108 = vpop.xlane.xlu0 %107
    %109 = vadd.xlane.f32.xlu0 %v37
    %v110 = vpop.xlane.xlu0 %109
    %111 = vadd.xlane.f32.xlu0 %v38
    %v112 = vpop.xlane.xlu0 %111
    %113 = vadd.xlane.f32.xlu0 %v39
    %v114 = vpop.xlane.xlu0 %113
    %115 = vadd.xlane.f32.xlu0 %v40
    %v116 = vpop.xlane.xlu0 %115
    %117 = vadd.xlane.f32.xlu0 %v41
    %v118 = vpop.xlane.xlu0 %117
    %119 = vadd.xlane.f32.xlu0 %v42
    %v120 = vpop.xlane.xlu0 %119
    %121 = vadd.xlane.f32.xlu0 %v43
    %v122 = vpop.xlane.xlu0 %121
    %123 = vadd.xlane.f32.xlu0 %v44
    %v124 = vpop.xlane.xlu0 %123
    %125 = vadd.xlane.f32.xlu0 %v45
    %v126 = vpop.xlane.xlu0 %125
    %127 = vadd.xlane.f32.xlu0 %v46
    %v128 = vpop.xlane.xlu0 %127
    %129 = vadd.xlane.f32.xlu0 %v47
    %v130 = vpop.xlane.xlu0 %129
    %131 = vadd.xlane.f32.xlu0 %v48
    %v132 = vpop.xlane.xlu0 %131
    %133 = vadd.xlane.f32.xlu0 %v49
    %v134 = vpop.xlane.xlu0 %133
    %135 = vadd.xlane.f32.xlu0 %v50
    %v136 = vpop.xlane.xlu0 %135
    %137 = vadd.xlane.f32.xlu0 %v51
    %v138 = vpop.xlane.xlu0 %137
    %139 = vadd.xlane.f32.xlu0 %v52
    %v140 = vpop.xlane.xlu0 %139
    %141 = vadd.xlane.f32.xlu0 %v53
    %v142 = vpop.xlane.xlu0 %141
    %143 = vadd.xlane.f32.xlu0 %v54
    %v144 = vpop.xlane.xlu0 %143
    %145 = vadd.xlane.f32.xlu0 %v55
    %v146 = vpop.xlane.xlu0 %145
    %147 = vadd.xlane.f32.xlu0 %v56
    %v148 = vpop.xlane.xlu0 %147
    %149 = vadd.xlane.f32.xlu0 %v57
    %v150 = vpop.xlane.xlu0 %149
    %151 = vadd.xlane.f32.xlu0 %v58
    %v152 = vpop.xlane.xlu0 %151
    %153 = vadd.xlane.f32.xlu0 %v59
    %v154 = vpop.xlane.xlu0 %153
    %155 = vadd.xlane.f32.xlu0 %v60
    %v156 = vpop.xlane.xlu0 %155
    %157 = vadd.xlane.f32.xlu0 %v61
    %v158 = vpop.xlane.xlu0 %157
    %159 = vadd.xlane.f32.xlu0 %v62
    %v160 = vpop.xlane.xlu0 %159
    %161 = vadd.xlane.f32.xlu0 %v63
    %v162 = vpop.xlane.xlu0 %161
    %163 = vadd.xlane.f32.xlu0 %v64
    %v164 = vpop.xlane.xlu0 %163
    %165 = vadd.xlane.f32.xlu0 %v65
    %v166 = vpop.xlane.xlu0 %165
    %167 = vadd.xlane.f32.xlu0 %v66
    %v168 = vpop.xlane.xlu0 %167
    %169 = vadd.xlane.f32.xlu0 %v67
    %v170 = vpop.xlane.xlu0 %169
    %171 = vadd.xlane.f32.xlu0 %v68
    %v172 = vpop.xlane.xlu0 %171
    %173 = vadd.xlane.f32.xlu0 %v69
    %v174 = vpop.xlane.xlu0 %173
    %175 = vadd.xlane.f32.xlu0 %v70
    %v176 = vpop.xlane.xlu0 %175
    %177 = vadd.xlane.f32.xlu0 %v71
    %v178 = vpop.xlane.xlu0 %177
    %179 = vadd.xlane.f32.xlu0 %v72
    %v180 = vpop.xlane.xlu0 %179
    %181 = vadd.xlane.f32.xlu0 %v73
    %v182 = vpop.xlane.xlu0 %181
    %183 = vadd.xlane.f32.xlu0 %v74
    %v184 = vpop.xlane.xlu0 %183
    %185 = vadd.xlane.f32.xlu0 %v75
    %v186 = vpop.xlane.xlu0 %185
    %187 = vadd.xlane.f32.xlu0 %v76
    %v188 = vpop.xlane.xlu0 %187
    %189 = vadd.xlane.f32.xlu0 %v77
    %v190 = vpop.xlane.xlu0 %189
    %191 = vadd.xlane.f32.xlu0 %v78
    %v192 = vpop.xlane.xlu0 %191
    %193 = vadd.xlane.f32.xlu0 %v79
    %v194 = vpop.xlane.xlu0 %193
    %195 = vadd.xlane.f32.xlu0 %v80
    %v196 = vpop.xlane.xlu0 %195
    %197 = vadd.xlane.f32.xlu0 %v81
    %v198 = vpop.xlane.xlu0 %197
    %199 = vadd.xlane.f32.xlu0 %v82
    %v200 = vpop.xlane.xlu0 %199
    %201 = vadd.xlane.f32.xlu0 %v83
    %v202 = vpop.xlane.xlu0 %201
    %203 = vadd.xlane.f32.xlu0 %v84
    %v204 = vpop.xlane.xlu0 %203
    %205 = vadd.xlane.f32.xlu0 %v85
    %v206 = vpop.xlane.xlu0 %205
    %207 = vadd.xlane.f32.xlu0 %v86
    %v208 = vpop.xlane.xlu0 %207
    %209 = vadd.xlane.f32.xlu0 %v87
    %v210 = vpop.xlane.xlu0 %209
    %211 = vadd.xlane.f32.xlu0 %v88
    %v212 = vpop.xlane.xlu0 %211
    %213 = vadd.xlane.f32.xlu0 %v89
    %v214 = vpop.xlane.xlu0 %213
    %215 = vadd.xlane.f32.xlu0 %v90
    %v216 = vpop.xlane.xlu0 %215
    %217 = vadd.xlane.f32.xlu0 %v91
    %v218 = vpop.xlane.xlu0 %217
    %219 = vadd.xlane.f32.xlu0 %v92
    %v220 = vpop.xlane.xlu0 %219
    %v221 = vmul.f32 %v94, 0.0078125
    %v222 = vmul.f32 %v96, 0.0078125
    %v223 = vmul.f32 %v98, 0.0078125
    %v224 = vmul.f32 %v100, 0.0078125
    %v225 = vmul.f32 %v102, 0.0078125
    %v226 = vmul.f32 %v104, 0.0078125
    %v227 = vmul.f32 %v106, 0.0078125
    %v228 = vmul.f32 %v108, 0.0078125
    %v229 = vmul.f32 %v110, 0.0078125
    %v230 = vmul.f32 %v112, 0.0078125
    %v231 = vmul.f32 %v114, 0.0078125
    %v232 = vmul.f32 %v116, 0.0078125
    %v233 = vmul.f32 %v118, 0.0078125
    %v234 = vmul.f32 %v120, 0.0078125
    %v235 = vmul.f32 %v122, 0.0078125
    %v236 = vmul.f32 %v124, 0.0078125
    %v237 = vmul.f32 %v126, 0.0078125
    %v238 = vmul.f32 %v128, 0.0078125
    %v239 = vmul.f32 %v130, 0.0078125
    %v240 = vmul.f32 %v132, 0.0078125
    %v241 = vmul.f32 %v134, 0.0078125
    %v242 = vmul.f32 %v136, 0.0078125
    %v243 = vmul.f32 %v138, 0.0078125
    %v244 = vmul.f32 %v140, 0.0078125
    %v245 = vmul.f32 %v142, 0.0078125
    %v246 = vmul.f32 %v144, 0.0078125
    %v247 = vmul.f32 %v146, 0.0078125
    %v248 = vmul.f32 %v148, 0.0078125
    %v249 = vmul.f32 %v150, 0.0078125
    %v250 = vmul.f32 %v152, 0.0078125
    %v251 = vmul.f32 %v154, 0.0078125
    %v252 = vmul.f32 %v156, 0.0078125
    %v253 = vmul.f32 %v158, 0.0078125
    %v254 = vmul.f32 %v160, 0.0078125
    %v255 = vmul.f32 %v162, 0.0078125
    %v256 = vmul.f32 %v164, 0.0078125
    %v257 = vmul.f32 %v166, 0.0078125
    %v258 = vmul.f32 %v168, 0.0078125
    %v259 = vmul.f32 %v170, 0.0078125
    %v260 = vmul.f32 %v172, 0.0078125
    %v261 = vmul.f32 %v174, 0.0078125
    %v262 = vmul.f32 %v176, 0.0078125
    %v263 = vmul.f32 %v178, 0.0078125
    %v264 = vmul.f32 %v180, 0.0078125
    %v265 = vmul.f32 %v182, 0.0078125
    %v266 = vmul.f32 %v184, 0.0078125
    %v267 = vmul.f32 %v186, 0.0078125
    %v268 = vmul.f32 %v188, 0.0078125
    %v269 = vmul.f32 %v190, 0.0078125
    %v270 = vmul.f32 %v192, 0.0078125
    %v271 = vmul.f32 %v194, 0.0078125
    %v272 = vmul.f32 %v196, 0.0078125
    %v273 = vmul.f32 %v198, 0.0078125
    %v274 = vmul.f32 %v200, 0.0078125
    %v275 = vmul.f32 %v202, 0.0078125
    %v276 = vmul.f32 %v204, 0.0078125
    %v277 = vmul.f32 %v206, 0.0078125
    %v278 = vmul.f32 %v208, 0.0078125
    %v279 = vmul.f32 %v210, 0.0078125
    %v280 = vmul.f32 %v212, 0.0078125
    %v281 = vmul.f32 %v214, 0.0078125
    %v282 = vmul.f32 %v216, 0.0078125
    %v283 = vmul.f32 %v218, 0.0078125
    %v284 = vmul.f32 %v220, 0.0078125
    %v285 = vsub.f32 %v29, %v221
    %v286 = vsub.f32 %v30, %v222
    %v287 = vsub.f32 %v31, %v223
    %v288 = vsub.f32 %v32, %v224
    %v289 = vsub.f32 %v33, %v225
    %v290 = vsub.f32 %v34, %v226
    %v291 = vsub.f32 %v35, %v227
    %v292 = vsub.f32 %v36, %v228
    %v293 = vsub.f32 %v37, %v229
    %v294 = vsub.f32 %v38, %v230
    %v295 = vsub.f32 %v39, %v231
    %v296 = vsub.f32 %v40, %v232
    %v297 = vsub.f32 %v41, %v233
    %v298 = vsub.f32 %v42, %v234
    %v299 = vsub.f32 %v43, %v235
    %v300 = vsub.f32 %v44, %v236
    %v301 = vsub.f32 %v45, %v237
    %v302 = vsub.f32 %v46, %v238
    %v303 = vsub.f32 %v47, %v239
    %v304 = vsub.f32 %v48, %v240
    %v305 = vsub.f32 %v49, %v241
    %v306 = vsub.f32 %v50, %v242
    %v307 = vsub.f32 %v51, %v243
    %v308 = vsub.f32 %v52, %v244
    %v309 = vsub.f32 %v53, %v245
    %v310 = vsub.f32 %v54, %v246
    %v311 = vsub.f32 %v55, %v247
    %v312 = vsub.f32 %v56, %v248
    %v313 = vsub.f32 %v57, %v249
    %v314 = vsub.f32 %v58, %v250
    %v315 = vsub.f32 %v59, %v251
    %v316 = vsub.f32 %v60, %v252
    %v317 = vsub.f32 %v61, %v253
    %v318 = vsub.f32 %v62, %v254
    %v319 = vsub.f32 %v63, %v255
    %v320 = vsub.f32 %v64, %v256
    %v321 = vsub.f32 %v65, %v257
    %v322 = vsub.f32 %v66, %v258
    %v323 = vsub.f32 %v67, %v259
    %v324 = vsub.f32 %v68, %v260
    %v325 = vsub.f32 %v69, %v261
    %v326 = vsub.f32 %v70, %v262
    %v327 = vsub.f32 %v71, %v263
    %v328 = vsub.f32 %v72, %v264
    %v329 = vsub.f32 %v73, %v265
    %v330 = vsub.f32 %v74, %v266
    %v331 = vsub.f32 %v75, %v267
    %v332 = vsub.f32 %v76, %v268
    %v333 = vsub.f32 %v77, %v269
    %v334 = vsub.f32 %v78, %v270
    %v335 = vsub.f32 %v79, %v271
    %v336 = vsub.f32 %v80, %v272
    %v337 = vsub.f32 %v81, %v273
    %v338 = vsub.f32 %v82, %v274
    %v339 = vsub.f32 %v83, %v275
    %v340 = vsub.f32 %v84, %v276
    %v341 = vsub.f32 %v85, %v277
    %v342 = vsub.f32 %v86, %v278
    %v343 = vsub.f32 %v87, %v279
    %v344 = vsub.f32 %v88, %v280
    %v345 = vsub.f32 %v89, %v281
    %v346 = vsub.f32 %v90, %v282
    %v347 = vsub.f32 %v91, %v283
    %v348 = vsub.f32 %v92, %v284
    %v349 = vmul.f32 %v285, %v285
    %v350 = vmul.f32 %v286, %v286
    %v351 = vmul.f32 %v287, %v287
    %v352 = vmul.f32 %v288, %v288
    %v353 = vmul.f32 %v289, %v289
    %v354 = vmul.f32 %v290, %v290
    %v355 = vmul.f32 %v291, %v291
    %v356 = vmul.f32 %v292, %v292
    %v357 = vmul.f32 %v293, %v293
    %v358 = vmul.f32 %v294, %v294
    %v359 = vmul.f32 %v295, %v295
    %v360 = vmul.f32 %v296, %v296
    %v361 = vmul.f32 %v297, %v297
    %v362 = vmul.f32 %v298, %v298
    %v363 = vmul.f32 %v299, %v299
    %v364 = vmul.f32 %v300, %v300
    %v365 = vmul.f32 %v301, %v301
    %v366 = vmul.f32 %v302, %v302
    %v367 = vmul.f32 %v303, %v303
    %v368 = vmul.f32 %v304, %v304
    %v369 = vmul.f32 %v305, %v305
    %v370 = vmul.f32 %v306, %v306
    %v371 = vmul.f32 %v307, %v307
    %v372 = vmul.f32 %v308, %v308
    %v373 = vmul.f32 %v309, %v309
    %v374 = vmul.f32 %v310, %v310
    %v375 = vmul.f32 %v311, %v311
    %v376 = vmul.f32 %v312, %v312
    %v377 = vmul.f32 %v313, %v313
    %v378 = vmul.f32 %v314, %v314
    %v379 = vmul.f32 %v315, %v315
    %v380 = vmul.f32 %v316, %v316
    %v381 = vmul.f32 %v317, %v317
    %v382 = vmul.f32 %v318, %v318
    %v383 = vmul.f32 %v319, %v319
    %v384 = vmul.f32 %v320, %v320
    %v385 = vmul.f32 %v321, %v321
    %v386 = vmul.f32 %v322, %v322
    %v387 = vmul.f32 %v323, %v323
    %v388 = vmul.f32 %v324, %v324
    %v389 = vmul.f32 %v325, %v325
    %v390 = vmul.f32 %v326, %v326
    %v391 = vmul.f32 %v327, %v327
    %v392 = vmul.f32 %v328, %v328
    %v393 = vmul.f32 %v329, %v329
    %v394 = vmul.f32 %v330, %v330
    %v395 = vmul.f32 %v331, %v331
    %v396 = vmul.f32 %v332, %v332
    %v397 = vmul.f32 %v333, %v333
    %v398 = vmul.f32 %v334, %v334
    %v399 = vmul.f32 %v335, %v335
    %v400 = vmul.f32 %v336, %v336
    %v401 = vmul.f32 %v337, %v337
    %v402 = vmul.f32 %v338, %v338
    %v403 = vmul.f32 %v339, %v339
    %v404 = vmul.f32 %v340, %v340
    %v405 = vmul.f32 %v341, %v341
    %v406 = vmul.f32 %v342, %v342
    %v407 = vmul.f32 %v343, %v343
    %v408 = vmul.f32 %v344, %v344
    %v409 = vmul.f32 %v345, %v345
    %v410 = vmul.f32 %v346, %v346
    %v411 = vmul.f32 %v347, %v347
    %v412 = vmul.f32 %v348, %v348
    %413 = vadd.xlane.f32.xlu0 %v349
    %v414 = vpop.xlane.xlu0 %413
    %415 = vadd.xlane.f32.xlu0 %v350
    %v416 = vpop.xlane.xlu0 %415
    %417 = vadd.xlane.f32.xlu0 %v351
    %v418 = vpop.xlane.xlu0 %417
    %419 = vadd.xlane.f32.xlu0 %v352
    %v420 = vpop.xlane.xlu0 %419
    %421 = vadd.xlane.f32.xlu0 %v353
    %v422 = vpop.xlane.xlu0 %421
    %423 = vadd.xlane.f32.xlu0 %v354
    %v424 = vpop.xlane.xlu0 %423
    %425 = vadd.xlane.f32.xlu0 %v355
    %v426 = vpop.xlane.xlu0 %425
    %427 = vadd.xlane.f32.xlu0 %v356
    %v428 = vpop.xlane.xlu0 %427
    %429 = vadd.xlane.f32.xlu0 %v357
    %v430 = vpop.xlane.xlu0 %429
    %431 = vadd.xlane.f32.xlu0 %v358
    %v432 = vpop.xlane.xlu0 %431
    %433 = vadd.xlane.f32.xlu0 %v359
    %v434 = vpop.xlane.xlu0 %433
    %435 = vadd.xlane.f32.xlu0 %v360
    %v436 = vpop.xlane.xlu0 %435
    %437 = vadd.xlane.f32.xlu0 %v361
    %v438 = vpop.xlane.xlu0 %437
    %439 = vadd.xlane.f32.xlu0 %v362
    %v440 = vpop.xlane.xlu0 %439
    %441 = vadd.xlane.f32.xlu0 %v363
    %v442 = vpop.xlane.xlu0 %441
    %443 = vadd.xlane.f32.xlu0 %v364
    %v444 = vpop.xlane.xlu0 %443
    %445 = vadd.xlane.f32.xlu0 %v365
    %v446 = vpop.xlane.xlu0 %445
    %447 = vadd.xlane.f32.xlu0 %v366
    %v448 = vpop.xlane.xlu0 %447
    %449 = vadd.xlane.f32.xlu0 %v367
    %v450 = vpop.xlane.xlu0 %449
    %451 = vadd.xlane.f32.xlu0 %v368
    %v452 = vpop.xlane.xlu0 %451
    %453 = vadd.xlane.f32.xlu0 %v369
    %v454 = vpop.xlane.xlu0 %453
    %455 = vadd.xlane.f32.xlu0 %v370
    %v456 = vpop.xlane.xlu0 %455
    %457 = vadd.xlane.f32.xlu0 %v371
    %v458 = vpop.xlane.xlu0 %457
    %459 = vadd.xlane.f32.xlu0 %v372
    %v460 = vpop.xlane.xlu0 %459
    %461 = vadd.xlane.f32.xlu0 %v373
    %v462 = vpop.xlane.xlu0 %461
    %463 = vadd.xlane.f32.xlu0 %v374
    %v464 = vpop.xlane.xlu0 %463
    %465 = vadd.xlane.f32.xlu0 %v375
    %v466 = vpop.xlane.xlu0 %465
    %467 = vadd.xlane.f32.xlu0 %v376
    %v468 = vpop.xlane.xlu0 %467
    %469 = vadd.xlane.f32.xlu0 %v377
    %v470 = vpop.xlane.xlu0 %469
    %471 = vadd.xlane.f32.xlu0 %v378
    %v472 = vpop.xlane.xlu0 %471
    %473 = vadd.xlane.f32.xlu0 %v379
    %v474 = vpop.xlane.xlu0 %473
    %475 = vadd.xlane.f32.xlu0 %v380
    %v476 = vpop.xlane.xlu0 %475
    %477 = vadd.xlane.f32.xlu0 %v381
    %v478 = vpop.xlane.xlu0 %477
    %479 = vadd.xlane.f32.xlu0 %v382
    %v480 = vpop.xlane.xlu0 %479
    %481 = vadd.xlane.f32.xlu0 %v383
    %v482 = vpop.xlane.xlu0 %481
    %483 = vadd.xlane.f32.xlu0 %v384
    %v484 = vpop.xlane.xlu0 %483
    %485 = vadd.xlane.f32.xlu0 %v385
    %v486 = vpop.xlane.xlu0 %485
    %487 = vadd.xlane.f32.xlu0 %v386
    %v488 = vpop.xlane.xlu0 %487
    %489 = vadd.xlane.f32.xlu0 %v387
    %v490 = vpop.xlane.xlu0 %489
    %491 = vadd.xlane.f32.xlu0 %v388
    %v492 = vpop.xlane.xlu0 %491
    %493 = vadd.xlane.f32.xlu0 %v389
    %v494 = vpop.xlane.xlu0 %493
    %495 = vadd.xlane.f32.xlu0 %v390
    %v496 = vpop.xlane.xlu0 %495
    %497 = vadd.xlane.f32.xlu0 %v391
    %v498 = vpop.xlane.xlu0 %497
    %499 = vadd.xlane.f32.xlu0 %v392
    %v500 = vpop.xlane.xlu0 %499
    %501 = vadd.xlane.f32.xlu0 %v393
    %v502 = vpop.xlane.xlu0 %501
    %503 = vadd.xlane.f32.xlu0 %v394
    %v504 = vpop.xlane.xlu0 %503
    %505 = vadd.xlane.f32.xlu0 %v395
    %v506 = vpop.xlane.xlu0 %505
    %507 = vadd.xlane.f32.xlu0 %v396
    %v508 = vpop.xlane.xlu0 %507
    %509 = vadd.xlane.f32.xlu0 %v397
    %v510 = vpop.xlane.xlu0 %509
    %511 = vadd.xlane.f32.xlu0 %v398
    %v512 = vpop.xlane.xlu0 %511
    %513 = vadd.xlane.f32.xlu0 %v399
    %v514 = vpop.xlane.xlu0 %513
    %515 = vadd.xlane.f32.xlu0 %v400
    %v516 = vpop.xlane.xlu0 %515
    %517 = vadd.xlane.f32.xlu0 %v401
    %v518 = vpop.xlane.xlu0 %517
    %519 = vadd.xlane.f32.xlu0 %v402
    %v520 = vpop.xlane.xlu0 %519
    %521 = vadd.xlane.f32.xlu0 %v403
    %v522 = vpop.xlane.xlu0 %521
    %523 = vadd.xlane.f32.xlu0 %v404
    %v524 = vpop.xlane.xlu0 %523
    %525 = vadd.xlane.f32.xlu0 %v405
    %v526 = vpop.xlane.xlu0 %525
    %527 = vadd.xlane.f32.xlu0 %v406
    %v528 = vpop.xlane.xlu0 %527
    %529 = vadd.xlane.f32.xlu0 %v407
    %v530 = vpop.xlane.xlu0 %529
    %531 = vadd.xlane.f32.xlu0 %v408
    %v532 = vpop.xlane.xlu0 %531
    %533 = vadd.xlane.f32.xlu0 %v409
    %v534 = vpop.xlane.xlu0 %533
    %535 = vadd.xlane.f32.xlu0 %v410
    %v536 = vpop.xlane.xlu0 %535
    %537 = vadd.xlane.f32.xlu0 %v411
    %v538 = vpop.xlane.xlu0 %537
    %539 = vadd.xlane.f32.xlu0 %v412
    %v540 = vpop.xlane.xlu0 %539
    %v541 = vmul.f32 %v414, 0.0078125
    %v542 = vmul.f32 %v416, 0.0078125
    %v543 = vmul.f32 %v418, 0.0078125
    %v544 = vmul.f32 %v420, 0.0078125
    %v545 = vmul.f32 %v422, 0.0078125
    %v546 = vmul.f32 %v424, 0.0078125
    %v547 = vmul.f32 %v426, 0.0078125
    %v548 = vmul.f32 %v428, 0.0078125
    %v549 = vmul.f32 %v430, 0.0078125
    %v550 = vmul.f32 %v432, 0.0078125
    %v551 = vmul.f32 %v434, 0.0078125
    %v552 = vmul.f32 %v436, 0.0078125
    %v553 = vmul.f32 %v438, 0.0078125
    %v554 = vmul.f32 %v440, 0.0078125
    %v555 = vmul.f32 %v442, 0.0078125
    %v556 = vmul.f32 %v444, 0.0078125
    %v557 = vmul.f32 %v446, 0.0078125
    %v558 = vmul.f32 %v448, 0.0078125
    %v559 = vmul.f32 %v450, 0.0078125
    %v560 = vmul.f32 %v452, 0.0078125
    %v561 = vmul.f32 %v454, 0.0078125
    %v562 = vmul.f32 %v456, 0.0078125
    %v563 = vmul.f32 %v458, 0.0078125
    %v564 = vmul.f32 %v460, 0.0078125
    %v565 = vmul.f32 %v462, 0.0078125
    %v566 = vmul.f32 %v464, 0.0078125
    %v567 = vmul.f32 %v466, 0.0078125
    %v568 = vmul.f32 %v468, 0.0078125
    %v569 = vmul.f32 %v470, 0.0078125
    %v570 = vmul.f32 %v472, 0.0078125
    %v571 = vmul.f32 %v474, 0.0078125
    %v572 = vmul.f32 %v476, 0.0078125
    %v573 = vmul.f32 %v478, 0.0078125
    %v574 = vmul.f32 %v480, 0.0078125
    %v575 = vmul.f32 %v482, 0.0078125
    %v576 = vmul.f32 %v484, 0.0078125
    %v577 = vmul.f32 %v486, 0.0078125
    %v578 = vmul.f32 %v488, 0.0078125
    %v579 = vmul.f32 %v490, 0.0078125
    %v580 = vmul.f32 %v492, 0.0078125
    %v581 = vmul.f32 %v494, 0.0078125
    %v582 = vmul.f32 %v496, 0.0078125
    %v583 = vmul.f32 %v498, 0.0078125
    %v584 = vmul.f32 %v500, 0.0078125
    %v585 = vmul.f32 %v502, 0.0078125
    %v586 = vmul.f32 %v504, 0.0078125
    %v587 = vmul.f32 %v506, 0.0078125
    %v588 = vmul.f32 %v508, 0.0078125
    %v589 = vmul.f32 %v510, 0.0078125
    %v590 = vmul.f32 %v512, 0.0078125
    %v591 = vmul.f32 %v514, 0.0078125
    %v592 = vmul.f32 %v516, 0.0078125
    %v593 = vmul.f32 %v518, 0.0078125
    %v594 = vmul.f32 %v520, 0.0078125
    %v595 = vmul.f32 %v522, 0.0078125
    %v596 = vmul.f32 %v524, 0.0078125
    %v597 = vmul.f32 %v526, 0.0078125
    %v598 = vmul.f32 %v528, 0.0078125
    %v599 = vmul.f32 %v530, 0.0078125
    %v600 = vmul.f32 %v532, 0.0078125
    %v601 = vmul.f32 %v534, 0.0078125
    %v602 = vmul.f32 %v536, 0.0078125
    %v603 = vmul.f32 %v538, 0.0078125
    %v604 = vmul.f32 %v540, 0.0078125
    %v605 = vadd.f32 %v541, 1e-06
    %v606 = vadd.f32 %v542, 1e-06
    %v607 = vadd.f32 %v543, 1e-06
    %v608 = vadd.f32 %v544, 1e-06
    %v609 = vadd.f32 %v545, 1e-06
    %v610 = vadd.f32 %v546, 1e-06
    %v611 = vadd.f32 %v547, 1e-06
    %v612 = vadd.f32 %v548, 1e-06
    %v613 = vadd.f32 %v549, 1e-06
    %v614 = vadd.f32 %v550, 1e-06
    %v615 = vadd.f32 %v551, 1e-06
    %v616 = vadd.f32 %v552, 1e-06
    %v617 = vadd.f32 %v553, 1e-06
    %v618 = vadd.f32 %v554, 1e-06
    %v619 = vadd.f32 %v555, 1e-06
    %v620 = vadd.f32 %v556, 1e-06
    %v621 = vadd.f32 %v557, 1e-06
    %v622 = vadd.f32 %v558, 1e-06
    %v623 = vadd.f32 %v559, 1e-06
    %v624 = vadd.f32 %v560, 1e-06
    %v625 = vadd.f32 %v561, 1e-06
    %v626 = vadd.f32 %v562, 1e-06
    %v627 = vadd.f32 %v563, 1e-06
    %v628 = vadd.f32 %v564, 1e-06
    %v629 = vadd.f32 %v565, 1e-06
    %v630 = vadd.f32 %v566, 1e-06
    %v631 = vadd.f32 %v567, 1e-06
    %v632 = vadd.f32 %v568, 1e-06
    %v633 = vadd.f32 %v569, 1e-06
    %v634 = vadd.f32 %v570, 1e-06
    %v635 = vadd.f32 %v571, 1e-06
    %v636 = vadd.f32 %v572, 1e-06
    %v637 = vadd.f32 %v573, 1e-06
    %v638 = vadd.f32 %v574, 1e-06
    %v639 = vadd.f32 %v575, 1e-06
    %v640 = vadd.f32 %v576, 1e-06
    %v641 = vadd.f32 %v577, 1e-06
    %v642 = vadd.f32 %v578, 1e-06
    %v643 = vadd.f32 %v579, 1e-06
    %v644 = vadd.f32 %v580, 1e-06
    %v645 = vadd.f32 %v581, 1e-06
    %v646 = vadd.f32 %v582, 1e-06
    %v647 = vadd.f32 %v583, 1e-06
    %v648 = vadd.f32 %v584, 1e-06
    %v649 = vadd.f32 %v585, 1e-06
    %v650 = vadd.f32 %v586, 1e-06
    %v651 = vadd.f32 %v587, 1e-06
    %v652 = vadd.f32 %v588, 1e-06
    %v653 = vadd.f32 %v589, 1e-06
    %v654 = vadd.f32 %v590, 1e-06
    %v655 = vadd.f32 %v591, 1e-06
    %v656 = vadd.f32 %v592, 1e-06
    %v657 = vadd.f32 %v593, 1e-06
    %v658 = vadd.f32 %v594, 1e-06
    %v659 = vadd.f32 %v595, 1e-06
    %v660 = vadd.f32 %v596, 1e-06
    %v661 = vadd.f32 %v597, 1e-06
    %v662 = vadd.f32 %v598, 1e-06
    %v663 = vadd.f32 %v599, 1e-06
    %v664 = vadd.f32 %v600, 1e-06
    %v665 = vadd.f32 %v601, 1e-06
    %v666 = vadd.f32 %v602, 1e-06
    %v667 = vadd.f32 %v603, 1e-06
    %v668 = vadd.f32 %v604, 1e-06
    %v669 = vrsqrt.pop %v605
    %v670 = vrsqrt.pop %v606
    %v671 = vrsqrt.pop %v607
    %v672 = vrsqrt.pop %v608
    %v673 = vrsqrt.pop %v609
    %v674 = vrsqrt.pop %v610
    %v675 = vrsqrt.pop %v611
    %v676 = vrsqrt.pop %v612
    %v677 = vrsqrt.pop %v613
    %v678 = vrsqrt.pop %v614
    %v679 = vrsqrt.pop %v615
    %v680 = vrsqrt.pop %v616
    %v681 = vrsqrt.pop %v617
    %v682 = vrsqrt.pop %v618
    %v683 = vrsqrt.pop %v619
    %v684 = vrsqrt.pop %v620
    %v685 = vrsqrt.pop %v621
    %v686 = vrsqrt.pop %v622
    %v687 = vrsqrt.pop %v623
    %v688 = vrsqrt.pop %v624
    %v689 = vrsqrt.pop %v625
    %v690 = vrsqrt.pop %v626
    %v691 = vrsqrt.pop %v627
    %v692 = vrsqrt.pop %v628
    %v693 = vrsqrt.pop %v629
    %v694 = vrsqrt.pop %v630
    %v695 = vrsqrt.pop %v631
    %v696 = vrsqrt.pop %v632
    %v697 = vrsqrt.pop %v633
    %v698 = vrsqrt.pop %v634
    %v699 = vrsqrt.pop %v635
    %v700 = vrsqrt.pop %v636
    %v701 = vrsqrt.pop %v637
    %v702 = vrsqrt.pop %v638
    %v703 = vrsqrt.pop %v639
    %v704 = vrsqrt.pop %v640
    %v705 = vrsqrt.pop %v641
    %v706 = vrsqrt.pop %v642
    %v707 = vrsqrt.pop %v643
    %v708 = vrsqrt.pop %v644
    %v709 = vrsqrt.pop %v645
    %v710 = vrsqrt.pop %v646
    %v711 = vrsqrt.pop %v647
    %v712 = vrsqrt.pop %v648
    %v713 = vrsqrt.pop %v649
    %v714 = vrsqrt.pop %v650
    %v715 = vrsqrt.pop %v651
    %v716 = vrsqrt.pop %v652
    %v717 = vrsqrt.pop %v653
    %v718 = vrsqrt.pop %v654
    %v719 = vrsqrt.pop %v655
    %v720 = vrsqrt.pop %v656
    %v721 = vrsqrt.pop %v657
    %v722 = vrsqrt.pop %v658
    %v723 = vrsqrt.pop %v659
    %v724 = vrsqrt.pop %v660
    %v725 = vrsqrt.pop %v661
    %v726 = vrsqrt.pop %v662
    %v727 = vrsqrt.pop %v663
    %v728 = vrsqrt.pop %v664
    %v729 = vrsqrt.pop %v665
    %v730 = vrsqrt.pop %v666
    %v731 = vrsqrt.pop %v667
    %v732 = vrsqrt.pop %v668
    %v733 = vmul.f32 %v285, %v669
    %v734 = vmul.f32 %v286, %v670
    %v735 = vmul.f32 %v287, %v671
    %v736 = vmul.f32 %v288, %v672
    %v737 = vmul.f32 %v289, %v673
    %v738 = vmul.f32 %v290, %v674
    %v739 = vmul.f32 %v291, %v675
    %v740 = vmul.f32 %v292, %v676
    %v741 = vmul.f32 %v293, %v677
    %v742 = vmul.f32 %v294, %v678
    %v743 = vmul.f32 %v295, %v679
    %v744 = vmul.f32 %v296, %v680
    %v745 = vmul.f32 %v297, %v681
    %v746 = vmul.f32 %v298, %v682
    %v747 = vmul.f32 %v299, %v683
    %v748 = vmul.f32 %v300, %v684
    %v749 = vmul.f32 %v301, %v685
    %v750 = vmul.f32 %v302, %v686
    %v751 = vmul.f32 %v303, %v687
    %v752 = vmul.f32 %v304, %v688
    %v753 = vmul.f32 %v305, %v689
    %v754 = vmul.f32 %v306, %v690
    %v755 = vmul.f32 %v307, %v691
    %v756 = vmul.f32 %v308, %v692
    %v757 = vmul.f32 %v309, %v693
    %v758 = vmul.f32 %v310, %v694
    %v759 = vmul.f32 %v311, %v695
    %v760 = vmul.f32 %v312, %v696
    %v761 = vmul.f32 %v313, %v697
    %v762 = vmul.f32 %v314, %v698
    %v763 = vmul.f32 %v315, %v699
    %v764 = vmul.f32 %v316, %v700
    %v765 = vmul.f32 %v317, %v701
    %v766 = vmul.f32 %v318, %v702
    %v767 = vmul.f32 %v319, %v703
    %v768 = vmul.f32 %v320, %v704
    %v769 = vmul.f32 %v321, %v705
    %v770 = vmul.f32 %v322, %v706
    %v771 = vmul.f32 %v323, %v707
    %v772 = vmul.f32 %v324, %v708
    %v773 = vmul.f32 %v325, %v709
    %v774 = vmul.f32 %v326, %v710
    %v775 = vmul.f32 %v327, %v711
    %v776 = vmul.f32 %v328, %v712
    %v777 = vmul.f32 %v329, %v713
    %v778 = vmul.f32 %v330, %v714
    %v779 = vmul.f32 %v331, %v715
    %v780 = vmul.f32 %v332, %v716
    %v781 = vmul.f32 %v333, %v717
    %v782 = vmul.f32 %v334, %v718
    %v783 = vmul.f32 %v335, %v719
    %v784 = vmul.f32 %v336, %v720
    %v785 = vmul.f32 %v337, %v721
    %v786 = vmul.f32 %v338, %v722
    %v787 = vmul.f32 %v339, %v723
    %v788 = vmul.f32 %v340, %v724
    %v789 = vmul.f32 %v341, %v725
    %v790 = vmul.f32 %v342, %v726
    %v791 = vmul.f32 %v343, %v727
    %v792 = vmul.f32 %v344, %v728
    %v793 = vmul.f32 %v345, %v729
    %v794 = vmul.f32 %v346, %v730
    %v795 = vmul.f32 %v347, %v731
    %v796 = vmul.f32 %v348, %v732
    %v797 = vld [vmem:[%s1] sm:$0x1]
    %v799 = vlaneseq
    %v800 = vshrl.u32 %v799, 7
    %v801 = vsub.s32 0, %v800
    %v802 = vrot.slane %v797, %v801
    %v804 = vmul.f32 %v733, %v802
    %v805 = vmul.f32 %v734, %v802
    %v806 = vmul.f32 %v735, %v802
    %v807 = vmul.f32 %v736, %v802
    %v808 = vmul.f32 %v737, %v802
    %v809 = vmul.f32 %v738, %v802
    %v810 = vmul.f32 %v739, %v802
    %v811 = vmul.f32 %v740, %v802
    %v812 = vmul.f32 %v741, %v802
    %v813 = vmul.f32 %v742, %v802
    %v814 = vmul.f32 %v743, %v802
    %v815 = vmul.f32 %v744, %v802
    %v816 = vmul.f32 %v745, %v802
    %v817 = vmul.f32 %v746, %v802
    %v818 = vmul.f32 %v747, %v802
    %v819 = vmul.f32 %v748, %v802
    %v820 = vmul.f32 %v749, %v802
    %v821 = vmul.f32 %v750, %v802
    %v822 = vmul.f32 %v751, %v802
    %v823 = vmul.f32 %v752, %v802
    %v824 = vmul.f32 %v753, %v802
    %v825 = vmul.f32 %v754, %v802
    %v826 = vmul.f32 %v755, %v802
    %v827 = vmul.f32 %v756, %v802
    %v828 = vmul.f32 %v757, %v802
    %v829 = vmul.f32 %v758, %v802
    %v830 = vmul.f32 %v759, %v802
    %v831 = vmul.f32 %v760, %v802
    %v832 = vmul.f32 %v761, %v802
    %v833 = vmul.f32 %v762, %v802
    %v834 = vmul.f32 %v763, %v802
    %v835 = vmul.f32 %v764, %v802
    %v836 = vmul.f32 %v765, %v802
    %v837 = vmul.f32 %v766, %v802
    %v838 = vmul.f32 %v767, %v802
    %v839 = vmul.f32 %v768, %v802
    %v840 = vmul.f32 %v769, %v802
    %v841 = vmul.f32 %v770, %v802
    %v842 = vmul.f32 %v771, %v802
    %v843 = vmul.f32 %v772, %v802
    %v844 = vmul.f32 %v773, %v802
    %v845 = vmul.f32 %v774, %v802
    %v846 = vmul.f32 %v775, %v802
    %v847 = vmul.f32 %v776, %v802
    %v848 = vmul.f32 %v777, %v802
    %v849 = vmul.f32 %v778, %v802
    %v850 = vmul.f32 %v779, %v802
    %v851 = vmul.f32 %v780, %v802
    %v852 = vmul.f32 %v781, %v802
    %v853 = vmul.f32 %v782, %v802
    %v854 = vmul.f32 %v783, %v802
    %v855 = vmul.f32 %v784, %v802
    %v856 = vmul.f32 %v785, %v802
    %v857 = vmul.f32 %v786, %v802
    %v858 = vmul.f32 %v787, %v802
    %v859 = vmul.f32 %v788, %v802
    %v860 = vmul.f32 %v789, %v802
    %v861 = vmul.f32 %v790, %v802
    %v862 = vmul.f32 %v791, %v802
    %v863 = vmul.f32 %v792, %v802
    %v864 = vmul.f32 %v793, %v802
    %v865 = vmul.f32 %v794, %v802
    %v866 = vmul.f32 %v795, %v802
    %v867 = vmul.f32 %v796, %v802
    %v868 = vld [vmem:[%s2] sm:$0x1]
    %v870 = vlaneseq
    %v871 = vshrl.u32 %v870, 7
    %v872 = vsub.s32 0, %v871
    %v873 = vrot.slane %v868, %v872
    %v875 = vadd.f32 %v804, %v873
    %v876 = vadd.f32 %v805, %v873
    %v877 = vadd.f32 %v806, %v873
    %v878 = vadd.f32 %v807, %v873
    %v879 = vadd.f32 %v808, %v873
    %v880 = vadd.f32 %v809, %v873
    %v881 = vadd.f32 %v810, %v873
    %v882 = vadd.f32 %v811, %v873
    %v883 = vadd.f32 %v812, %v873
    %v884 = vadd.f32 %v813, %v873
    %v885 = vadd.f32 %v814, %v873
    %v886 = vadd.f32 %v815, %v873
    %v887 = vadd.f32 %v816, %v873
    %v888 = vadd.f32 %v817, %v873
    %v889 = vadd.f32 %v818, %v873
    %v890 = vadd.f32 %v819, %v873
    %v891 = vadd.f32 %v820, %v873
    %v892 = vadd.f32 %v821, %v873
    %v893 = vadd.f32 %v822, %v873
    %v894 = vadd.f32 %v823, %v873
    %v895 = vadd.f32 %v824, %v873
    %v896 = vadd.f32 %v825, %v873
    %v897 = vadd.f32 %v826, %v873
    %v898 = vadd.f32 %v827, %v873
    %v899 = vadd.f32 %v828, %v873
    %v900 = vadd.f32 %v829, %v873
    %v901 = vadd.f32 %v830, %v873
    %v902 = vadd.f32 %v831, %v873
    %v903 = vadd.f32 %v832, %v873
    %v904 = vadd.f32 %v833, %v873
    %v905 = vadd.f32 %v834, %v873
    %v906 = vadd.f32 %v835, %v873
    %v907 = vadd.f32 %v836, %v873
    %v908 = vadd.f32 %v837, %v873
    %v909 = vadd.f32 %v838, %v873
    %v910 = vadd.f32 %v839, %v873
    %v911 = vadd.f32 %v840, %v873
    %v912 = vadd.f32 %v841, %v873
    %v913 = vadd.f32 %v842, %v873
    %v914 = vadd.f32 %v843, %v873
    %v915 = vadd.f32 %v844, %v873
    %v916 = vadd.f32 %v845, %v873
    %v917 = vadd.f32 %v846, %v873
    %v918 = vadd.f32 %v847, %v873
    %v919 = vadd.f32 %v848, %v873
    %v920 = vadd.f32 %v849, %v873
    %v921 = vadd.f32 %v850, %v873
    %v922 = vadd.f32 %v851, %v873
    %v923 = vadd.f32 %v852, %v873
    %v924 = vadd.f32 %v853, %v873
    %v925 = vadd.f32 %v854, %v873
    %v926 = vadd.f32 %v855, %v873
    %v927 = vadd.f32 %v856, %v873
    %v928 = vadd.f32 %v857, %v873
    %v929 = vadd.f32 %v858, %v873
    %v930 = vadd.f32 %v859, %v873
    %v931 = vadd.f32 %v860, %v873
    %v932 = vadd.f32 %v861, %v873
    %v933 = vadd.f32 %v862, %v873
    %v934 = vadd.f32 %v863, %v873
    %v935 = vadd.f32 %v864, %v873
    %v936 = vadd.f32 %v865, %v873
    %v937 = vadd.f32 %v866, %v873
    %v938 = vadd.f32 %v867, %v873
    %939 = vst [vmem:[#allocation5] sm:$0xff] %v875
    %940 = vst [vmem:[#allocation5 + $0x8] sm:$0xff] %v876
    %941 = vst [vmem:[#allocation5 + $0x10] sm:$0xff] %v877
    %942 = vst [vmem:[#allocation5 + $0x18] sm:$0xff] %v878
    %943 = vst [vmem:[#allocation5 + $0x20] sm:$0xff] %v879
    %944 = vst [vmem:[#allocation5 + $0x28] sm:$0xff] %v880
    %945 = vst [vmem:[#allocation5 + $0x30] sm:$0xff] %v881
    %946 = vst [vmem:[#allocation5 + $0x38] sm:$0xff] %v882
    %947 = vst [vmem:[#allocation5 + $0x40] sm:$0xff] %v883
    %948 = vst [vmem:[#allocation5 + $0x48] sm:$0xff] %v884
    %949 = vst [vmem:[#allocation5 + $0x50] sm:$0xff] %v885
    %950 = vst [vmem:[#allocation5 + $0x58] sm:$0xff] %v886
    %951 = vst [vmem:[#allocation5 + $0x60] sm:$0xff] %v887
    %952 = vst [vmem:[#allocation5 + $0x68] sm:$0xff] %v888
    %953 = vst [vmem:[#allocation5 + $0x70] sm:$0xff] %v889
    %954 = vst [vmem:[#allocation5 + $0x78] sm:$0xff] %v890
    %955 = vst [vmem:[#allocation5 + $0x80] sm:$0xff] %v891
    %956 = vst [vmem:[#allocation5 + $0x88] sm:$0xff] %v892
    %957 = vst [vmem:[#allocation5 + $0x90] sm:$0xff] %v893
    %958 = vst [vmem:[#allocation5 + $0x98] sm:$0xff] %v894
    %959 = vst [vmem:[#allocation5 + $0xa0] sm:$0xff] %v895
    %960 = vst [vmem:[#allocation5 + $0xa8] sm:$0xff] %v896
    %961 = vst [vmem:[#allocation5 + $0xb0] sm:$0xff] %v897
    %962 = vst [vmem:[#allocation5 + $0xb8] sm:$0xff] %v898
    %963 = vst [vmem:[#allocation5 + $0xc0] sm:$0xff] %v899
    %964 = vst [vmem:[#allocation5 + $0xc8] sm:$0xff] %v900
    %965 = vst [vmem:[#allocation5 + $0xd0] sm:$0xff] %v901
    %966 = vst [vmem:[#allocation5 + $0xd8] sm:$0xff] %v902
    %967 = vst [vmem:[#allocation5 + $0xe0] sm:$0xff] %v903
    %968 = vst [vmem:[#allocation5 + $0xe8] sm:$0xff] %v904
    %969 = vst [vmem:[#allocation5 + $0xf0] sm:$0xff] %v905
    %970 = vst [vmem:[#allocation5 + $0xf8] sm:$0xff] %v906
    %971 = vst [vmem:[#allocation5 + $0x100] sm:$0xff] %v907
    %972 = vst [vmem:[#allocation5 + $0x108] sm:$0xff] %v908
    %973 = vst [vmem:[#allocation5 + $0x110] sm:$0xff] %v909
    %974 = vst [vmem:[#allocation5 + $0x118] sm:$0xff] %v910
    %975 = vst [vmem:[#allocation5 + $0x120] sm:$0xff] %v911
    %976 = vst [vmem:[#allocation5 + $0x128] sm:$0xff] %v912
    %977 = vst [vmem:[#allocation5 + $0x130] sm:$0xff] %v913
    %978 = vst [vmem:[#allocation5 + $0x138] sm:$0xff] %v914
    %979 = vst [vmem:[#allocation5 + $0x140] sm:$0xff] %v915
    %980 = vst [vmem:[#allocation5 + $0x148] sm:$0xff] %v916
    %981 = vst [vmem:[#allocation5 + $0x150] sm:$0xff] %v917
    %982 = vst [vmem:[#allocation5 + $0x158] sm:$0xff] %v918
    %983 = vst [vmem:[#allocation5 + $0x160] sm:$0xff] %v919
    %984 = vst [vmem:[#allocation5 + $0x168] sm:$0xff] %v920
    %985 = vst [vmem:[#allocation5 + $0x170] sm:$0xff] %v921
    %986 = vst [vmem:[#allocation5 + $0x178] sm:$0xff] %v922
    %987 = vst [vmem:[#allocation5 + $0x180] sm:$0xff] %v923
    %988 = vst [vmem:[#allocation5 + $0x188] sm:$0xff] %v924
    %989 = vst [vmem:[#allocation5 + $0x190] sm:$0xff] %v925
    %990 = vst [vmem:[#allocation5 + $0x198] sm:$0xff] %v926
    %991 = vst [vmem:[#allocation5 + $0x1a0] sm:$0xff] %v927
    %992 = vst [vmem:[#allocation5 + $0x1a8] sm:$0xff] %v928
    %993 = vst [vmem:[#allocation5 + $0x1b0] sm:$0xff] %v929
    %994 = vst [vmem:[#allocation5 + $0x1b8] sm:$0xff] %v930
    %995 = vst [vmem:[#allocation5 + $0x1c0] sm:$0xff] %v931
    %996 = vst [vmem:[#allocation5 + $0x1c8] sm:$0xff] %v932
    %997 = vst [vmem:[#allocation5 + $0x1d0] sm:$0xff] %v933
    %998 = vst [vmem:[#allocation5 + $0x1d8] sm:$0xff] %v934
    %999 = vst [vmem:[#allocation5 + $0x1e0] sm:$0xff] %v935
    %1000 = vst [vmem:[#allocation5 + $0x1e8] sm:$0xff] %v936
    %1001 = vst [vmem:[#allocation5 + $0x1f0] sm:$0xff] %v937
    %1002 = vst [vmem:[#allocation5 + $0x1f8] sm:$0xff] %v938
    // Predicated region
    $region18: #{layer_norm.1} parent=1 // pred_check
      _
    $region19: #{layer_norm.1} parent=1 // pred_check_branch
      %1004 = sbr.rel (0) target = $region21
    $region20: #{layer_norm.1} parent=1 // pred_region
      %s1006 = ssub.s32 8192, 8192
      %1007 = vsyncadd [#allocation4], %s1006
      %s1008 = sshll.u32 [#allocation5], 4
      %s1009 = int_to_ptr.vmem [resolvable:$true] %s1008
      %1014 = dma.vmem_to_hbm [thread:$0]  %s1009, 8192, %s3, [#allocation4], 128, 128, 8
    $region21: #{layer_norm.1} parent=1 // pred_fallthru
      _
    // Predicated region
    $region22: #{layer_norm.1} parent=1 // pred_check
      _
    $region23: #{layer_norm.1} parent=1 // pred_check_branch
      %1016 = sbr.rel (0) target = $region25
    $region24: #{layer_norm.1} parent=1 // pred_region
      %1017 = dma.done [#allocation4], 8192
    $region25: #{layer_norm.1} parent=1 // pred_fallthru
      _
    %1018 = vsyncpa [#allocation3], 1
    %1019 = vsyncpa [#allocation4], 1

</llo_original>
